<compile_context>
chip_gen: v7x
topology: tpu7x:2x2x1
jax: 0.10.0
libtpu: 0.0.40
codegen_flags: <defaults>
</compile_context>

<pallas_src>
import functools

import jax
import jax.numpy as jnp
from jax.experimental import pallas as pl
from jax.experimental.pallas import tpu as pltpu

NUM_LAYERS = 8
PAD = 128      # lane-aligned padded feature width for every layer
MAX_TB = 256   # batch-tile rows: fills the 256-wide MXU; ~128 KiB f32 per block


def _round_up(n, m):
    return (n + m - 1) // m * m


def mlp_kernel(x_ref, w_ref, b_ref, out_ref):
    """One batch tile of the whole 8-layer MLP, fully VMEM-resident.

    x_ref  : (TB, 128)    f32   padded activations (BN folded into layer 0)
    w_ref  : (8, 128, 128) bf16 zero-padded stacked weights, (in, out) per layer
    b_ref  : (8, 128)     f32   zero-padded stacked biases
    out_ref: (TB, 128)    f32   lane-dense output; real logits in [:, :out_dim]
    """
    h = x_ref[...]
    # Static Python loop -> fully unrolled; each jnp.dot is one bf16 MXU pass
    # with f32 accumulation.  Zero-padded lanes stay exactly zero through every
    # layer (0-weight rows/cols, 0 bias, ReLU(0)=0), so padding never perturbs
    # the real lanes.
    for l in range(NUM_LAYERS):
        w = w_ref[l]                   # (128, 128) bf16, static index -> no copy
        b = b_ref[pl.ds(l, 1), :]      # (1, 128) f32, broadcasts over batch rows
        h = jnp.dot(h.astype(jnp.bfloat16), w,
                    preferred_element_type=jnp.float32) + b
        if l < NUM_LAYERS - 1:
            h = jnp.maximum(h, 0.0)    # ReLU (Dropout == identity in eval)
    out_ref[...] = h


def pack_model_params(bn_params, linears, weight_dtype=jnp.bfloat16):
    """One-time, init-time packing (NOT on the per-call path).

    bn_params: (gamma, beta, running_mean, running_var), each (input_dim,).
    linears  : list of 8 (W, b) pairs; W is (in, out), b is (out,).
    Returns (w_stack (8,128,128) weight_dtype, b_stack (8,128) f32, out_dim).
    """
    gamma, beta, r_mean, r_var = (p.astype(jnp.float32) for p in bn_params)
    eps = 1e-5
    inv_std = 1.0 / jnp.sqrt(r_var + eps)
    scale = gamma * inv_std                      # (input_dim,)
    shift = beta - r_mean * scale                # (input_dim,)

    # Fold BN (eval) into the first Linear layer.
    w1 = linears[0][0].astype(jnp.float32)
    b1 = linears[0][1].astype(jnp.float32)
    folded = [(scale[:, None] * w1, shift @ w1 + b1)]
    folded += [(w.astype(jnp.float32), b.astype(jnp.float32))
               for (w, b) in linears[1:]]

    # Zero-pad every layer to a uniform (128,128)/(128,) slab and stack.
    # The 8x over-padding (~512 KiB f32 / 256 KiB bf16 vs ~61 KiB real) is a
    # deliberate trade for uniform, lane-dense (last dim = 128) stacking.
    w_stack = jnp.stack([
        jnp.pad(w, ((0, PAD - w.shape[0]), (0, PAD - w.shape[1])))
        for (w, _) in folded])
    b_stack = jnp.stack([jnp.pad(b, (0, PAD - b.shape[0])) for (_, b) in folded])

    out_dim = linears[-1][0].shape[1]
    return w_stack.astype(weight_dtype), b_stack.astype(jnp.float32), out_dim


@functools.partial(jax.jit, static_argnames=("out_dim",))
def model_sequential_forward(x, w_stack, b_stack, *, out_dim):
    """Steady-state forward: pad x, run the batch-tiled kernel, slice logits."""
    B, input_dim = x.shape
    tb = min(MAX_TB, _round_up(B, 8))            # batch tile (multiple of 8)
    b_pad = _round_up(B, tb)

    x_pad = jnp.pad(x.astype(jnp.float32),
                    ((0, b_pad - B), (0, PAD - input_dim)))

    out_pad = pl.pallas_call(
        mlp_kernel,
        out_shape=jax.ShapeDtypeStruct((b_pad, PAD), jnp.float32),
        grid=(b_pad // tb,),
        in_specs=[
            # Activations: tiled over the batch grid (double-buffered DMA).
            pl.BlockSpec((tb, PAD), lambda i: (i, 0)),
            # Weights / biases: constant index map -> DMA'd once, VMEM-resident
            # across all batch tiles.
            pl.BlockSpec((NUM_LAYERS, PAD, PAD), lambda i: (0, 0, 0)),
            pl.BlockSpec((NUM_LAYERS, PAD), lambda i: (0, 0)),
        ],
        out_specs=pl.BlockSpec((tb, PAD), lambda i: (i, 0)),
        compiler_params=pltpu.CompilerParams(
            dimension_semantics=("parallel",)),   # megacore sharding on v7x
    )(x_pad, w_stack, b_stack)

    # Lane-dense store inside the kernel; slice padding away outside (free).
    return out_pad[:B, :out_dim]


def _reference_forward(x, bn_params, linears):
    """Pure-JAX f32 reference matching the PyTorch module in eval mode."""
    gamma, beta, r_mean, r_var = bn_params
    h = (x - r_mean) / jnp.sqrt(r_var + 1e-5) * gamma + beta
    for i, (w, b) in enumerate(linears):
        h = h @ w + b
        if i < len(linears) - 1:
            h = jnp.maximum(h, 0.0)
    return h


if __name__ == "__main__":
    # Small dims consistent with the module signature
    input_dim, hid_dim, hid_dim2, hid_dim3, hid_dim4, output_dim = 32, 64, 64, 32, 32, 8
    batch = 8

    key = jax.random.PRNGKey(0)
    keys = jax.random.split(key, 32)

    x = jax.random.normal(keys[0], (batch, input_dim), dtype=jnp.float32)

    # Deterministic synthetic BatchNorm1d parameters / running stats
    gamma = 1.0 + 0.1 * jax.random.normal(keys[1], (input_dim,), dtype=jnp.float32)
    beta = 0.1 * jax.random.normal(keys[2], (input_dim,), dtype=jnp.float32)
    r_mean = 0.05 * jax.random.normal(keys[3], (input_dim,), dtype=jnp.float32)
    r_var = 1.0 + 0.1 * jax.random.uniform(keys[4], (input_dim,), dtype=jnp.float32)
    bn_params = (gamma, beta, r_mean, r_var)

    # Eight Linear layers: shapes taken from the nn.Sequential definition
    layer_dims = [
        (input_dim, hid_dim),
        (hid_dim, hid_dim),
        (hid_dim, hid_dim2),
        (hid_dim2, hid_dim2),
        (hid_dim2, hid_dim3),
        (hid_dim3, hid_dim3),
        (hid_dim3, hid_dim4),
        (hid_dim4, output_dim),
    ]
    linears = []
    k_idx = 5
    for (din, dout) in layer_dims:
        bound = 1.0 / (din ** 0.5)  # torch nn.Linear default init range
        w = jax.random.uniform(keys[k_idx], (din, dout), jnp.float32, -bound, bound)
        b = jax.random.uniform(keys[k_idx + 1], (dout,), jnp.float32, -bound, bound)
        linears.append((w, b))
        k_idx += 2

    # One-time packing (init-time), then jitted steady-state forward.
    w_stack, b_stack, out_dim = pack_model_params(bn_params, linears)
    w_stack = jax.block_until_ready(w_stack)
    b_stack = jax.block_until_ready(b_stack)

    out = model_sequential_forward(x, w_stack, b_stack, out_dim=out_dim)
    out = jax.block_until_ready(out)

    ref = _reference_forward(x, bn_params, linears)
    assert out.shape == (batch, output_dim)
    # bf16 weights + activations inside the kernel -> loosened tolerance vs the
    # full-f32 reference.
    assert jnp.allclose(out, ref, atol=5e-2, rtol=5e-2), "mismatch vs JAX reference"

    print("KERNEL_OK")
</pallas_src>

<mosaic_0001>
module attributes {stable_mosaic.version = 11 : i64} {
  func.func @mlp_kernel(%arg0: i32, %arg1: memref<8x128xf32, #tpu.memory_space<vmem>>, %arg2: memref<8x128x128xbf16, #tpu.memory_space<vmem>>, %arg3: memref<8x128xf32, #tpu.memory_space<vmem>>, %arg4: memref<8x128xf32, #tpu.memory_space<vmem>>) attributes {dimension_semantics = [#tpu.dimension_semantics<parallel>], iteration_bounds = array<i64: 1>, scalar_prefetch = 0 : i64, scratch_operands = 0 : i64, tpu.core_type = #tpu.core_type<tc>, window_params = [{transform_indices = @transform_0, window_bounds = array<i64: 8, 128>}, {pipeline_mode = #tpu.pipeline_mode<synchronous>, transform_indices = @transform_1, window_bounds = array<i64: 8, 128, 128>}, {pipeline_mode = #tpu.pipeline_mode<synchronous>, transform_indices = @transform_2, window_bounds = array<i64: 8, 128>}, {transform_indices = @transform_3, window_bounds = array<i64: 8, 128>}]} {
    %c0 = arith.constant 0 : index
    %c0_0 = arith.constant 0 : index
    %0 = vector.load %arg1[%c0, %c0_0] : memref<8x128xf32, #tpu.memory_space<vmem>>, vector<8x128xf32>
    %c0_1 = arith.constant 0 : index
    %c0_2 = arith.constant 0 : index
    %c0_3 = arith.constant 0 : index
    %1 = vector.load %arg2[%c0_1, %c0_2, %c0_3] : memref<8x128x128xbf16, #tpu.memory_space<vmem>>, vector<1x128x128xbf16>
    %2 = vector.shape_cast %1 : vector<1x128x128xbf16> to vector<128x128xbf16>
    %c0_4 = arith.constant 0 : index
    %c0_5 = arith.constant 0 : index
    %3 = vector.load %arg3[%c0_4, %c0_5] : memref<8x128xf32, #tpu.memory_space<vmem>>, vector<1x128xf32>
    %4 = arith.truncf %0 : vector<8x128xf32> to vector<8x128xbf16>
    %cst = arith.constant dense<0.000000e+00> : vector<8x128xf32>
    %5 = tpu.matmul %4, %2, %cst {dimension_numbers = #tpu.dot_dimension_numbers<[1], [0], [0], [1], [0, 0, 1, 1], [], []>} : vector<8x128xbf16>, vector<128x128xbf16>, vector<8x128xf32> -> vector<8x128xf32>
    %6 = vector.broadcast %3 : vector<1x128xf32> to vector<8x128xf32>
    %7 = arith.addf %5, %6 : vector<8x128xf32>
    %cst_6 = arith.constant 0.000000e+00 : f32
    %8 = vector.broadcast %cst_6 : f32 to vector<8x128xf32>
    %9 = arith.maximumf %7, %8 : vector<8x128xf32>
    %c1 = arith.constant 1 : index
    %c0_7 = arith.constant 0 : index
    %c0_8 = arith.constant 0 : index
    %10 = vector.load %arg2[%c1, %c0_7, %c0_8] : memref<8x128x128xbf16, #tpu.memory_space<vmem>>, vector<1x128x128xbf16>
    %11 = vector.shape_cast %10 : vector<1x128x128xbf16> to vector<128x128xbf16>
    %c1_9 = arith.constant 1 : index
    %c0_10 = arith.constant 0 : index
    %12 = vector.load %arg3[%c1_9, %c0_10] : memref<8x128xf32, #tpu.memory_space<vmem>>, vector<1x128xf32>
    %13 = arith.truncf %9 : vector<8x128xf32> to vector<8x128xbf16>
    %cst_11 = arith.constant dense<0.000000e+00> : vector<8x128xf32>
    %14 = tpu.matmul %13, %11, %cst_11 {dimension_numbers = #tpu.dot_dimension_numbers<[1], [0], [0], [1], [0, 0, 1, 1], [], []>} : vector<8x128xbf16>, vector<128x128xbf16>, vector<8x128xf32> -> vector<8x128xf32>
    %15 = vector.broadcast %12 : vector<1x128xf32> to vector<8x128xf32>
    %16 = arith.addf %14, %15 : vector<8x128xf32>
    %cst_12 = arith.constant 0.000000e+00 : f32
    %17 = vector.broadcast %cst_12 : f32 to vector<8x128xf32>
    %18 = arith.maximumf %16, %17 : vector<8x128xf32>
    %c2 = arith.constant 2 : index
    %c0_13 = arith.constant 0 : index
    %c0_14 = arith.constant 0 : index
    %19 = vector.load %arg2[%c2, %c0_13, %c0_14] : memref<8x128x128xbf16, #tpu.memory_space<vmem>>, vector<1x128x128xbf16>
    %20 = vector.shape_cast %19 : vector<1x128x128xbf16> to vector<128x128xbf16>
    %c2_15 = arith.constant 2 : index
    %c0_16 = arith.constant 0 : index
    %21 = vector.load %arg3[%c2_15, %c0_16] : memref<8x128xf32, #tpu.memory_space<vmem>>, vector<1x128xf32>
    %22 = arith.truncf %18 : vector<8x128xf32> to vector<8x128xbf16>
    %cst_17 = arith.constant dense<0.000000e+00> : vector<8x128xf32>
    %23 = tpu.matmul %22, %20, %cst_17 {dimension_numbers = #tpu.dot_dimension_numbers<[1], [0], [0], [1], [0, 0, 1, 1], [], []>} : vector<8x128xbf16>, vector<128x128xbf16>, vector<8x128xf32> -> vector<8x128xf32>
    %24 = vector.broadcast %21 : vector<1x128xf32> to vector<8x128xf32>
    %25 = arith.addf %23, %24 : vector<8x128xf32>
    %cst_18 = arith.constant 0.000000e+00 : f32
    %26 = vector.broadcast %cst_18 : f32 to vector<8x128xf32>
    %27 = arith.maximumf %25, %26 : vector<8x128xf32>
    %c3 = arith.constant 3 : index
    %c0_19 = arith.constant 0 : index
    %c0_20 = arith.constant 0 : index
    %28 = vector.load %arg2[%c3, %c0_19, %c0_20] : memref<8x128x128xbf16, #tpu.memory_space<vmem>>, vector<1x128x128xbf16>
    %29 = vector.shape_cast %28 : vector<1x128x128xbf16> to vector<128x128xbf16>
    %c3_21 = arith.constant 3 : index
    %c0_22 = arith.constant 0 : index
    %30 = vector.load %arg3[%c3_21, %c0_22] : memref<8x128xf32, #tpu.memory_space<vmem>>, vector<1x128xf32>
    %31 = arith.truncf %27 : vector<8x128xf32> to vector<8x128xbf16>
    %cst_23 = arith.constant dense<0.000000e+00> : vector<8x128xf32>
    %32 = tpu.matmul %31, %29, %cst_23 {dimension_numbers = #tpu.dot_dimension_numbers<[1], [0], [0], [1], [0, 0, 1, 1], [], []>} : vector<8x128xbf16>, vector<128x128xbf16>, vector<8x128xf32> -> vector<8x128xf32>
    %33 = vector.broadcast %30 : vector<1x128xf32> to vector<8x128xf32>
    %34 = arith.addf %32, %33 : vector<8x128xf32>
    %cst_24 = arith.constant 0.000000e+00 : f32
    %35 = vector.broadcast %cst_24 : f32 to vector<8x128xf32>
    %36 = arith.maximumf %34, %35 : vector<8x128xf32>
    %c4 = arith.constant 4 : index
    %c0_25 = arith.constant 0 : index
    %c0_26 = arith.constant 0 : index
    %37 = vector.load %arg2[%c4, %c0_25, %c0_26] : memref<8x128x128xbf16, #tpu.memory_space<vmem>>, vector<1x128x128xbf16>
    %38 = vector.shape_cast %37 : vector<1x128x128xbf16> to vector<128x128xbf16>
    %c4_27 = arith.constant 4 : index
    %c0_28 = arith.constant 0 : index
    %39 = vector.load %arg3[%c4_27, %c0_28] : memref<8x128xf32, #tpu.memory_space<vmem>>, vector<1x128xf32>
    %40 = arith.truncf %36 : vector<8x128xf32> to vector<8x128xbf16>
    %cst_29 = arith.constant dense<0.000000e+00> : vector<8x128xf32>
    %41 = tpu.matmul %40, %38, %cst_29 {dimension_numbers = #tpu.dot_dimension_numbers<[1], [0], [0], [1], [0, 0, 1, 1], [], []>} : vector<8x128xbf16>, vector<128x128xbf16>, vector<8x128xf32> -> vector<8x128xf32>
    %42 = vector.broadcast %39 : vector<1x128xf32> to vector<8x128xf32>
    %43 = arith.addf %41, %42 : vector<8x128xf32>
    %cst_30 = arith.constant 0.000000e+00 : f32
    %44 = vector.broadcast %cst_30 : f32 to vector<8x128xf32>
    %45 = arith.maximumf %43, %44 : vector<8x128xf32>
    %c5 = arith.constant 5 : index
    %c0_31 = arith.constant 0 : index
    %c0_32 = arith.constant 0 : index
    %46 = vector.load %arg2[%c5, %c0_31, %c0_32] : memref<8x128x128xbf16, #tpu.memory_space<vmem>>, vector<1x128x128xbf16>
    %47 = vector.shape_cast %46 : vector<1x128x128xbf16> to vector<128x128xbf16>
    %c5_33 = arith.constant 5 : index
    %c0_34 = arith.constant 0 : index
    %48 = vector.load %arg3[%c5_33, %c0_34] : memref<8x128xf32, #tpu.memory_space<vmem>>, vector<1x128xf32>
    %49 = arith.truncf %45 : vector<8x128xf32> to vector<8x128xbf16>
    %cst_35 = arith.constant dense<0.000000e+00> : vector<8x128xf32>
    %50 = tpu.matmul %49, %47, %cst_35 {dimension_numbers = #tpu.dot_dimension_numbers<[1], [0], [0], [1], [0, 0, 1, 1], [], []>} : vector<8x128xbf16>, vector<128x128xbf16>, vector<8x128xf32> -> vector<8x128xf32>
    %51 = vector.broadcast %48 : vector<1x128xf32> to vector<8x128xf32>
    %52 = arith.addf %50, %51 : vector<8x128xf32>
    %cst_36 = arith.constant 0.000000e+00 : f32
    %53 = vector.broadcast %cst_36 : f32 to vector<8x128xf32>
    %54 = arith.maximumf %52, %53 : vector<8x128xf32>
    %c6 = arith.constant 6 : index
    %c0_37 = arith.constant 0 : index
    %c0_38 = arith.constant 0 : index
    %55 = vector.load %arg2[%c6, %c0_37, %c0_38] : memref<8x128x128xbf16, #tpu.memory_space<vmem>>, vector<1x128x128xbf16>
    %56 = vector.shape_cast %55 : vector<1x128x128xbf16> to vector<128x128xbf16>
    %c6_39 = arith.constant 6 : index
    %c0_40 = arith.constant 0 : index
    %57 = vector.load %arg3[%c6_39, %c0_40] : memref<8x128xf32, #tpu.memory_space<vmem>>, vector<1x128xf32>
    %58 = arith.truncf %54 : vector<8x128xf32> to vector<8x128xbf16>
    %cst_41 = arith.constant dense<0.000000e+00> : vector<8x128xf32>
    %59 = tpu.matmul %58, %56, %cst_41 {dimension_numbers = #tpu.dot_dimension_numbers<[1], [0], [0], [1], [0, 0, 1, 1], [], []>} : vector<8x128xbf16>, vector<128x128xbf16>, vector<8x128xf32> -> vector<8x128xf32>
    %60 = vector.broadcast %57 : vector<1x128xf32> to vector<8x128xf32>
    %61 = arith.addf %59, %60 : vector<8x128xf32>
    %cst_42 = arith.constant 0.000000e+00 : f32
    %62 = vector.broadcast %cst_42 : f32 to vector<8x128xf32>
    %63 = arith.maximumf %61, %62 : vector<8x128xf32>
    %c7 = arith.constant 7 : index
    %c0_43 = arith.constant 0 : index
    %c0_44 = arith.constant 0 : index
    %64 = vector.load %arg2[%c7, %c0_43, %c0_44] : memref<8x128x128xbf16, #tpu.memory_space<vmem>>, vector<1x128x128xbf16>
    %65 = vector.shape_cast %64 : vector<1x128x128xbf16> to vector<128x128xbf16>
    %c7_45 = arith.constant 7 : index
    %c0_46 = arith.constant 0 : index
    %66 = vector.load %arg3[%c7_45, %c0_46] : memref<8x128xf32, #tpu.memory_space<vmem>>, vector<1x128xf32>
    %67 = arith.truncf %63 : vector<8x128xf32> to vector<8x128xbf16>
    %cst_47 = arith.constant dense<0.000000e+00> : vector<8x128xf32>
    %68 = tpu.matmul %67, %65, %cst_47 {dimension_numbers = #tpu.dot_dimension_numbers<[1], [0], [0], [1], [0, 0, 1, 1], [], []>} : vector<8x128xbf16>, vector<128x128xbf16>, vector<8x128xf32> -> vector<8x128xf32>
    %69 = vector.broadcast %66 : vector<1x128xf32> to vector<8x128xf32>
    %70 = arith.addf %68, %69 : vector<8x128xf32>
    %c0_48 = arith.constant 0 : index
    %c0_49 = arith.constant 0 : index
    %71 = vector.load %arg4[%c0_48, %c0_49] : memref<8x128xf32, #tpu.memory_space<vmem>>, vector<8x128xf32>
    tpu.vector_store %arg4[%c0_48, %c0_49], %70 {strides = array<i32>} : memref<8x128xf32, #tpu.memory_space<vmem>>, vector<8x128xf32>,
    return
  }
  func.func @transform_0(%arg0: i32) -> (i32, i32) {
    %c0_i32 = arith.constant 0 : i32
    %c0_i32_0 = arith.constant 0 : i32
    return %arg0, %c0_i32 : i32, i32
  }
  func.func @transform_1(%arg0: i32) -> (i32, i32, i32) {
    %c0_i32 = arith.constant 0 : i32
    %c0_i32_0 = arith.constant 0 : i32
    %c0_i32_1 = arith.constant 0 : i32
    %c0_i32_2 = arith.constant 0 : i32
    return %c0_i32, %c0_i32_0, %c0_i32_1 : i32, i32, i32
  }
  func.func @transform_2(%arg0: i32) -> (i32, i32) {
    %c0_i32 = arith.constant 0 : i32
    %c0_i32_0 = arith.constant 0 : i32
    %c0_i32_1 = arith.constant 0 : i32
    return %c0_i32, %c0_i32_0 : i32, i32
  }
  func.func @transform_3(%arg0: i32) -> (i32, i32) {
    %c0_i32 = arith.constant 0 : i32
    %c0_i32_0 = arith.constant 0 : i32
    return %arg0, %c0_i32 : i32, i32
  }
}

</mosaic_0001>

<llo_original>
// kernel: model_sequential_forward.1
$region0: #{model_sequential_forward.1}
  #allocation0 [shape = 'u32[]', space=smem, size = 0x4, offset = 0x4, fixed_abs, tag = 'smem constant byte address 0x4 - core index']
  #allocation1 [shape = 'u32[144,128]{1,0:T(1,128)}', space=vmem, size = 0x12000, scoped, tag = 'internal scratch']
  %s0 = inlined_call_operand.vmem [shape: f32[8,128], index: 0, kind: input, shape index: {}]
  %s1 = inlined_call_operand.hbm [shape: bf16[8,128,128], index: 1, kind: input, shape index: {}]
  %s2 = inlined_call_operand.vmem [shape: f32[8,128], index: 2, kind: input, shape index: {}]
  %s3 = inlined_call_operand.hbm [shape: f32[8,128], index: 3, kind: output, shape index: {}]
  %s4 = sld [smem:[#allocation0]]
  $region26: #{model_sequential_forward.1} parent=0
    _
  %s6 = ssub.s32 1, %s4
  %s7 = scalar_select 0, %s6, %s4
  $region1: #{model_sequential_forward.1} parent=0
    #allocation2 [shape = 'u8[262144]{0}', space=vmem, size = 0x40000, scoped, tag = 'input window, operand 1, single buffered']
    #allocation3 [shape = 's32[1]{0}', space=sflag, size = 0x4, scoped, tag = 'scoped memory for model_sequential_forward.1']
    #allocation4 [shape = 's32[1]{0}', space=sflag, size = 0x4, scoped, tag = 'scoped memory for model_sequential_forward.1']
    #allocation5 [shape = 'u8[4096]{0}', space=vmem, size = 0x1000, scoped, tag = 'output window, operand 0, single buffered']
    %8 = vsyncpa [#allocation3], 0
    %9 = vsyncpa [#allocation4], 0
    // Predicated region
    $region2: #{model_sequential_forward.1} parent=1 // pred_check
      _
    $region3: #{model_sequential_forward.1} parent=1 // pred_check_branch
      %11 = sbr.rel (0) target = $region5
    $region4: #{model_sequential_forward.1} parent=1 // pred_region
      _
    $region5: #{model_sequential_forward.1} parent=1 // pred_fallthru
      _
    // Predicated region
    $region6: #{model_sequential_forward.1} parent=1 // pred_check
      _
    $region7: #{model_sequential_forward.1} parent=1 // pred_check_branch
      %13 = sbr.rel (0) target = $region9
    $region8: #{model_sequential_forward.1} parent=1 // pred_region
      %s15 = ssub.s32 8192, 8192
      %16 = vsyncadd [#allocation3], %s15
      %s17 = sshll.u32 [#allocation2], 4
      %s18 = int_to_ptr.vmem [resolvable:$true] %s17
      %23 = dma.hbm_to_vmem [thread:$0]  %s1, 8192, %s18, [#allocation3], 64, 64, 4
    $region9: #{model_sequential_forward.1} parent=1 // pred_fallthru
      _
    // Predicated region
    $region10: #{model_sequential_forward.1} parent=1 // pred_check
      _
    $region11: #{model_sequential_forward.1} parent=1 // pred_check_branch
      %25 = sbr.rel (0) target = $region13
    $region12: #{model_sequential_forward.1} parent=1 // pred_region
      _
    $region13: #{model_sequential_forward.1} parent=1 // pred_fallthru
      _
    // Predicated region
    $region14: #{model_sequential_forward.1} parent=1 // pred_check
      _
    $region15: #{model_sequential_forward.1} parent=1 // pred_check_branch
      %27 = sbr.rel (0) target = $region17
    $region16: #{model_sequential_forward.1} parent=1 // pred_region
      %28 = dma.done [#allocation3], 8192
    $region17: #{model_sequential_forward.1} parent=1 // pred_fallthru
      _
    %v30 = vld [vmem:[%s0] sm:$0xff]
    %v31 = vld [vmem:[#allocation2] sm:$0xf]
    %v32 = vld [vmem:[#allocation2 + $0x4] sm:$0xf]
    %v33 = vld [vmem:[#allocation2 + $0x8] sm:$0xf]
    %v34 = vld [vmem:[#allocation2 + $0xc] sm:$0xf]
    %v35 = vld [vmem:[#allocation2 + $0x10] sm:$0xf]
    %v36 = vld [vmem:[#allocation2 + $0x14] sm:$0xf]
    %v37 = vld [vmem:[#allocation2 + $0x18] sm:$0xf]
    %v38 = vld [vmem:[#allocation2 + $0x1c] sm:$0xf]
    %v39 = vld [vmem:[#allocation2 + $0x20] sm:$0xf]
    %v40 = vld [vmem:[#allocation2 + $0x24] sm:$0xf]
    %v41 = vld [vmem:[#allocation2 + $0x28] sm:$0xf]
    %v42 = vld [vmem:[#allocation2 + $0x2c] sm:$0xf]
    %v43 = vld [vmem:[#allocation2 + $0x30] sm:$0xf]
    %v44 = vld [vmem:[#allocation2 + $0x34] sm:$0xf]
    %v45 = vld [vmem:[#allocation2 + $0x38] sm:$0xf]
    %v46 = vld [vmem:[#allocation2 + $0x3c] sm:$0xf]
    %v47 = vld [vmem:[%s2] sm:$0x1]
    %v48 = vpack.c.bf16 %v30, %v30
    %v49 = vlaneseq
    %v50 = vshrl.u32 %v49, 7
    %v51 = vsub.s32 0, %v50
    %v52 = vrot.slane %v47, %v51
    %v69 = vunpack.c.l.b16 %v31
    %v70 = vunpack.c.l.b16 %v32
    %v71 = vunpack.c.l.b16 %v33
    %v72 = vunpack.c.l.b16 %v34
    %v73 = vunpack.c.l.b16 %v35
    %v74 = vunpack.c.l.b16 %v36
    %v75 = vunpack.c.l.b16 %v37
    %v76 = vunpack.c.l.b16 %v38
    %v77 = vunpack.c.l.b16 %v39
    %v78 = vunpack.c.l.b16 %v40
    %v79 = vunpack.c.l.b16 %v41
    %v80 = vunpack.c.l.b16 %v42
    %v81 = vunpack.c.l.b16 %v43
    %v82 = vunpack.c.l.b16 %v44
    %v83 = vunpack.c.l.b16 %v45
    %v84 = vunpack.c.l.b16 %v46
    %v85 = vpack.c.b16 %v70, %v69
    %v86 = vpack.c.b16 %v72, %v71
    %v87 = vpack.c.b16 %v74, %v73
    %v88 = vpack.c.b16 %v76, %v75
    %v89 = vpack.c.b16 %v78, %v77
    %v90 = vpack.c.b16 %v80, %v79
    %v91 = vpack.c.b16 %v82, %v81
    %v92 = vpack.c.b16 %v84, %v83
    %101 = vmatprep.subr.bf16.mxu0 0
    %102 = vmatpush1.bf16.msra.mxu0 %v85
    %103 = vmatprep.subr.bf16.mxu0 0
    %104 = vmatpush1.bf16.msra.mxu0 %v86
    %105 = vmatprep.subr.bf16.mxu0 0
    %106 = vmatpush1.bf16.msra.mxu0 %v87
    %107 = vmatprep.subr.bf16.mxu0 0
    %108 = vmatpush1.bf16.msra.mxu0 %v88
    %109 = vmatprep.subr.bf16.mxu0 0
    %110 = vmatpush1.bf16.msra.mxu0 %v89
    %111 = vmatprep.subr.bf16.mxu0 0
    %112 = vmatpush1.bf16.msra.mxu0 %v90
    %113 = vmatprep.subr.bf16.mxu0 0
    %114 = vmatpush1.bf16.msra.mxu0 %v91
    %115 = vmatprep.subr.bf16.mxu0 0
    %116 = vmatpush1.bf16.msra.mxu0 %v92
    %117 = vmatprep.subr.bf16.mxu0 0
    %118 = vmatpush1.bf16.msra.mxu0 0
    %119 = vmatprep.subr.bf16.mxu0 0
    %120 = vmatpush1.bf16.msra.mxu0 0
    %121 = vmatprep.subr.bf16.mxu0 0
    %122 = vmatpush1.bf16.msra.mxu0 0
    %123 = vmatprep.subr.bf16.mxu0 0
    %124 = vmatpush1.bf16.msra.mxu0 0
    %125 = vmatprep.subr.bf16.mxu0 0
    %126 = vmatpush1.bf16.msra.mxu0 0
    %127 = vmatprep.subr.bf16.mxu0 0
    %128 = vmatpush1.bf16.msra.mxu0 0
    %129 = vmatprep.subr.bf16.mxu0 0
    %130 = vmatpush1.bf16.msra.mxu0 0
    %131 = vmatprep.subr.bf16.mxu0 0
    %132 = vmatpush1.bf16.msra.mxu0 0
    %133 = vmatprep.mubr.bf16.mxu0 0
    %134 = vmatmul.mubr.bf16.gmra.mrb[0].mxu0 %v48
    %v135 = vpop.f32.mrb[0].mxu0
    %v136 = vadd.f32 %v52, %v135
    %v137 = vpop.f32.mrb[0].mxu0
    %v138 = vpop.f32.mrb[0].mxu0
    %v139 = vpop.f32.mrb[0].mxu0
    %140 = vdwg.mxu0
    %v141 = vmax.f32 %v136, 0.0
    %s142 = scalar_lea.vmem [#allocation2], 64
    %v143 = vld [vmem:[%s142] sm:$0xf]
    %v144 = vld [vmem:[%s142 + $0x4] sm:$0xf]
    %v145 = vld [vmem:[%s142 + $0x8] sm:$0xf]
    %v146 = vld [vmem:[%s142 + $0xc] sm:$0xf]
    %v147 = vld [vmem:[%s142 + $0x10] sm:$0xf]
    %v148 = vld [vmem:[%s142 + $0x14] sm:$0xf]
    %v149 = vld [vmem:[%s142 + $0x18] sm:$0xf]
    %v150 = vld [vmem:[%s142 + $0x1c] sm:$0xf]
    %v151 = vld [vmem:[%s142 + $0x20] sm:$0xf]
    %v152 = vld [vmem:[%s142 + $0x24] sm:$0xf]
    %v153 = vld [vmem:[%s142 + $0x28] sm:$0xf]
    %v154 = vld [vmem:[%s142 + $0x2c] sm:$0xf]
    %v155 = vld [vmem:[%s142 + $0x30] sm:$0xf]
    %v156 = vld [vmem:[%s142 + $0x34] sm:$0xf]
    %v157 = vld [vmem:[%s142 + $0x38] sm:$0xf]
    %v158 = vld [vmem:[%s142 + $0x3c] sm:$0xf]
    %v159 = vld [vmem:[%s2 + $0x1] sm:$0x1]
    %v160 = vpack.c.bf16 %v141, %v141
    %v161 = vlaneseq
    %v162 = vshrl.u32 %v161, 7
    %v163 = vsub.s32 0, %v162
    %v164 = vrot.slane %v159, %v163
    %v181 = vunpack.c.l.b16 %v143
    %v182 = vunpack.c.l.b16 %v144
    %v183 = vunpack.c.l.b16 %v145
    %v184 = vunpack.c.l.b16 %v146
    %v185 = vunpack.c.l.b16 %v147
    %v186 = vunpack.c.l.b16 %v148
    %v187 = vunpack.c.l.b16 %v149
    %v188 = vunpack.c.l.b16 %v150
    %v189 = vunpack.c.l.b16 %v151
    %v190 = vunpack.c.l.b16 %v152
    %v191 = vunpack.c.l.b16 %v153
    %v192 = vunpack.c.l.b16 %v154
    %v193 = vunpack.c.l.b16 %v155
    %v194 = vunpack.c.l.b16 %v156
    %v195 = vunpack.c.l.b16 %v157
    %v196 = vunpack.c.l.b16 %v158
    %v197 = vpack.c.b16 %v182, %v181
    %v198 = vpack.c.b16 %v184, %v183
    %v199 = vpack.c.b16 %v186, %v185
    %v200 = vpack.c.b16 %v188, %v187
    %v201 = vpack.c.b16 %v190, %v189
    %v202 = vpack.c.b16 %v192, %v191
    %v203 = vpack.c.b16 %v194, %v193
    %v204 = vpack.c.b16 %v196, %v195
    %213 = vmatprep.subr.bf16.mxu0 0
    %214 = vmatpush1.bf16.msra.mxu0 %v197
    %215 = vmatprep.subr.bf16.mxu0 0
    %216 = vmatpush1.bf16.msra.mxu0 %v198
    %217 = vmatprep.subr.bf16.mxu0 0
    %218 = vmatpush1.bf16.msra.mxu0 %v199
    %219 = vmatprep.subr.bf16.mxu0 0
    %220 = vmatpush1.bf16.msra.mxu0 %v200
    %221 = vmatprep.subr.bf16.mxu0 0
    %222 = vmatpush1.bf16.msra.mxu0 %v201
    %223 = vmatprep.subr.bf16.mxu0 0
    %224 = vmatpush1.bf16.msra.mxu0 %v202
    %225 = vmatprep.subr.bf16.mxu0 0
    %226 = vmatpush1.bf16.msra.mxu0 %v203
    %227 = vmatprep.subr.bf16.mxu0 0
    %228 = vmatpush1.bf16.msra.mxu0 %v204
    %229 = vmatprep.subr.bf16.mxu0 0
    %230 = vmatpush1.bf16.msra.mxu0 0
    %231 = vmatprep.subr.bf16.mxu0 0
    %232 = vmatpush1.bf16.msra.mxu0 0
    %233 = vmatprep.subr.bf16.mxu0 0
    %234 = vmatpush1.bf16.msra.mxu0 0
    %235 = vmatprep.subr.bf16.mxu0 0
    %236 = vmatpush1.bf16.msra.mxu0 0
    %237 = vmatprep.subr.bf16.mxu0 0
    %238 = vmatpush1.bf16.msra.mxu0 0
    %239 = vmatprep.subr.bf16.mxu0 0
    %240 = vmatpush1.bf16.msra.mxu0 0
    %241 = vmatprep.subr.bf16.mxu0 0
    %242 = vmatpush1.bf16.msra.mxu0 0
    %243 = vmatprep.subr.bf16.mxu0 0
    %244 = vmatpush1.bf16.msra.mxu0 0
    %245 = vmatprep.mubr.bf16.mxu0 0
    %246 = vmatmul.mubr.bf16.gmra.mrb[0].mxu0 %v160
    %v247 = vpop.f32.mrb[0].mxu0
    %v248 = vadd.f32 %v164, %v247
    %v249 = vpop.f32.mrb[0].mxu0
    %v250 = vpop.f32.mrb[0].mxu0
    %v251 = vpop.f32.mrb[0].mxu0
    %252 = vdwg.mxu0
    %v253 = vmax.f32 %v248, 0.0
    %s254 = scalar_lea.vmem [#allocation2], 128
    %v255 = vld [vmem:[%s254] sm:$0xf]
    %v256 = vld [vmem:[%s254 + $0x4] sm:$0xf]
    %v257 = vld [vmem:[%s254 + $0x8] sm:$0xf]
    %v258 = vld [vmem:[%s254 + $0xc] sm:$0xf]
    %v259 = vld [vmem:[%s254 + $0x10] sm:$0xf]
    %v260 = vld [vmem:[%s254 + $0x14] sm:$0xf]
    %v261 = vld [vmem:[%s254 + $0x18] sm:$0xf]
    %v262 = vld [vmem:[%s254 + $0x1c] sm:$0xf]
    %v263 = vld [vmem:[%s254 + $0x20] sm:$0xf]
    %v264 = vld [vmem:[%s254 + $0x24] sm:$0xf]
    %v265 = vld [vmem:[%s254 + $0x28] sm:$0xf]
    %v266 = vld [vmem:[%s254 + $0x2c] sm:$0xf]
    %v267 = vld [vmem:[%s254 + $0x30] sm:$0xf]
    %v268 = vld [vmem:[%s254 + $0x34] sm:$0xf]
    %v269 = vld [vmem:[%s254 + $0x38] sm:$0xf]
    %v270 = vld [vmem:[%s254 + $0x3c] sm:$0xf]
    %v271 = vld [vmem:[%s2 + $0x2] sm:$0x1]
    %v272 = vpack.c.bf16 %v253, %v253
    %v273 = vlaneseq
    %v274 = vshrl.u32 %v273, 7
    %v275 = vsub.s32 0, %v274
    %v276 = vrot.slane %v271, %v275
    %v293 = vunpack.c.l.b16 %v255
    %v294 = vunpack.c.l.b16 %v256
    %v295 = vunpack.c.l.b16 %v257
    %v296 = vunpack.c.l.b16 %v258
    %v297 = vunpack.c.l.b16 %v259
    %v298 = vunpack.c.l.b16 %v260
    %v299 = vunpack.c.l.b16 %v261
    %v300 = vunpack.c.l.b16 %v262
    %v301 = vunpack.c.l.b16 %v263
    %v302 = vunpack.c.l.b16 %v264
    %v303 = vunpack.c.l.b16 %v265
    %v304 = vunpack.c.l.b16 %v266
    %v305 = vunpack.c.l.b16 %v267
    %v306 = vunpack.c.l.b16 %v268
    %v307 = vunpack.c.l.b16 %v269
    %v308 = vunpack.c.l.b16 %v270
    %v309 = vpack.c.b16 %v294, %v293
    %v310 = vpack.c.b16 %v296, %v295
    %v311 = vpack.c.b16 %v298, %v297
    %v312 = vpack.c.b16 %v300, %v299
    %v313 = vpack.c.b16 %v302, %v301
    %v314 = vpack.c.b16 %v304, %v303
    %v315 = vpack.c.b16 %v306, %v305
    %v316 = vpack.c.b16 %v308, %v307
    %325 = vmatprep.subr.bf16.mxu0 0
    %326 = vmatpush1.bf16.msra.mxu0 %v309
    %327 = vmatprep.subr.bf16.mxu0 0
    %328 = vmatpush1.bf16.msra.mxu0 %v310
    %329 = vmatprep.subr.bf16.mxu0 0
    %330 = vmatpush1.bf16.msra.mxu0 %v311
    %331 = vmatprep.subr.bf16.mxu0 0
    %332 = vmatpush1.bf16.msra.mxu0 %v312
    %333 = vmatprep.subr.bf16.mxu0 0
    %334 = vmatpush1.bf16.msra.mxu0 %v313
    %335 = vmatprep.subr.bf16.mxu0 0
    %336 = vmatpush1.bf16.msra.mxu0 %v314
    %337 = vmatprep.subr.bf16.mxu0 0
    %338 = vmatpush1.bf16.msra.mxu0 %v315
    %339 = vmatprep.subr.bf16.mxu0 0
    %340 = vmatpush1.bf16.msra.mxu0 %v316
    %341 = vmatprep.subr.bf16.mxu0 0
    %342 = vmatpush1.bf16.msra.mxu0 0
    %343 = vmatprep.subr.bf16.mxu0 0
    %344 = vmatpush1.bf16.msra.mxu0 0
    %345 = vmatprep.subr.bf16.mxu0 0
    %346 = vmatpush1.bf16.msra.mxu0 0
    %347 = vmatprep.subr.bf16.mxu0 0
    %348 = vmatpush1.bf16.msra.mxu0 0
    %349 = vmatprep.subr.bf16.mxu0 0
    %350 = vmatpush1.bf16.msra.mxu0 0
    %351 = vmatprep.subr.bf16.mxu0 0
    %352 = vmatpush1.bf16.msra.mxu0 0
    %353 = vmatprep.subr.bf16.mxu0 0
    %354 = vmatpush1.bf16.msra.mxu0 0
    %355 = vmatprep.subr.bf16.mxu0 0
    %356 = vmatpush1.bf16.msra.mxu0 0
    %357 = vmatprep.mubr.bf16.mxu0 0
    %358 = vmatmul.mubr.bf16.gmra.mrb[0].mxu0 %v272
    %v359 = vpop.f32.mrb[0].mxu0
    %v360 = vadd.f32 %v276, %v359
    %v361 = vpop.f32.mrb[0].mxu0
    %v362 = vpop.f32.mrb[0].mxu0
    %v363 = vpop.f32.mrb[0].mxu0
    %364 = vdwg.mxu0
    %v365 = vmax.f32 %v360, 0.0
    %s366 = scalar_lea.vmem [#allocation2], 192
    %v367 = vld [vmem:[%s366] sm:$0xf]
    %v368 = vld [vmem:[%s366 + $0x4] sm:$0xf]
    %v369 = vld [vmem:[%s366 + $0x8] sm:$0xf]
    %v370 = vld [vmem:[%s366 + $0xc] sm:$0xf]
    %v371 = vld [vmem:[%s366 + $0x10] sm:$0xf]
    %v372 = vld [vmem:[%s366 + $0x14] sm:$0xf]
    %v373 = vld [vmem:[%s366 + $0x18] sm:$0xf]
    %v374 = vld [vmem:[%s366 + $0x1c] sm:$0xf]
    %v375 = vld [vmem:[%s366 + $0x20] sm:$0xf]
    %v376 = vld [vmem:[%s366 + $0x24] sm:$0xf]
    %v377 = vld [vmem:[%s366 + $0x28] sm:$0xf]
    %v378 = vld [vmem:[%s366 + $0x2c] sm:$0xf]
    %v379 = vld [vmem:[%s366 + $0x30] sm:$0xf]
    %v380 = vld [vmem:[%s366 + $0x34] sm:$0xf]
    %v381 = vld [vmem:[%s366 + $0x38] sm:$0xf]
    %v382 = vld [vmem:[%s366 + $0x3c] sm:$0xf]
    %v383 = vld [vmem:[%s2 + $0x3] sm:$0x1]
    %v384 = vpack.c.bf16 %v365, %v365
    %v385 = vlaneseq
    %v386 = vshrl.u32 %v385, 7
    %v387 = vsub.s32 0, %v386
    %v388 = vrot.slane %v383, %v387
    %v405 = vunpack.c.l.b16 %v367
    %v406 = vunpack.c.l.b16 %v368
    %v407 = vunpack.c.l.b16 %v369
    %v408 = vunpack.c.l.b16 %v370
    %v409 = vunpack.c.l.b16 %v371
    %v410 = vunpack.c.l.b16 %v372
    %v411 = vunpack.c.l.b16 %v373
    %v412 = vunpack.c.l.b16 %v374
    %v413 = vunpack.c.l.b16 %v375
    %v414 = vunpack.c.l.b16 %v376
    %v415 = vunpack.c.l.b16 %v377
    %v416 = vunpack.c.l.b16 %v378
    %v417 = vunpack.c.l.b16 %v379
    %v418 = vunpack.c.l.b16 %v380
    %v419 = vunpack.c.l.b16 %v381
    %v420 = vunpack.c.l.b16 %v382
    %v421 = vpack.c.b16 %v406, %v405
    %v422 = vpack.c.b16 %v408, %v407
    %v423 = vpack.c.b16 %v410, %v409
    %v424 = vpack.c.b16 %v412, %v411
    %v425 = vpack.c.b16 %v414, %v413
    %v426 = vpack.c.b16 %v416, %v415
    %v427 = vpack.c.b16 %v418, %v417
    %v428 = vpack.c.b16 %v420, %v419
    %437 = vmatprep.subr.bf16.mxu0 0
    %438 = vmatpush1.bf16.msra.mxu0 %v421
    %439 = vmatprep.subr.bf16.mxu0 0
    %440 = vmatpush1.bf16.msra.mxu0 %v422
    %441 = vmatprep.subr.bf16.mxu0 0
    %442 = vmatpush1.bf16.msra.mxu0 %v423
    %443 = vmatprep.subr.bf16.mxu0 0
    %444 = vmatpush1.bf16.msra.mxu0 %v424
    %445 = vmatprep.subr.bf16.mxu0 0
    %446 = vmatpush1.bf16.msra.mxu0 %v425
    %447 = vmatprep.subr.bf16.mxu0 0
    %448 = vmatpush1.bf16.msra.mxu0 %v426
    %449 = vmatprep.subr.bf16.mxu0 0
    %450 = vmatpush1.bf16.msra.mxu0 %v427
    %451 = vmatprep.subr.bf16.mxu0 0
    %452 = vmatpush1.bf16.msra.mxu0 %v428
    %453 = vmatprep.subr.bf16.mxu0 0
    %454 = vmatpush1.bf16.msra.mxu0 0
    %455 = vmatprep.subr.bf16.mxu0 0
    %456 = vmatpush1.bf16.msra.mxu0 0
    %457 = vmatprep.subr.bf16.mxu0 0
    %458 = vmatpush1.bf16.msra.mxu0 0
    %459 = vmatprep.subr.bf16.mxu0 0
    %460 = vmatpush1.bf16.msra.mxu0 0
    %461 = vmatprep.subr.bf16.mxu0 0
    %462 = vmatpush1.bf16.msra.mxu0 0
    %463 = vmatprep.subr.bf16.mxu0 0
    %464 = vmatpush1.bf16.msra.mxu0 0
    %465 = vmatprep.subr.bf16.mxu0 0
    %466 = vmatpush1.bf16.msra.mxu0 0
    %467 = vmatprep.subr.bf16.mxu0 0
    %468 = vmatpush1.bf16.msra.mxu0 0
    %469 = vmatprep.mubr.bf16.mxu0 0
    %470 = vmatmul.mubr.bf16.gmra.mrb[0].mxu0 %v384
    %v471 = vpop.f32.mrb[0].mxu0
    %v472 = vadd.f32 %v388, %v471
    %v473 = vpop.f32.mrb[0].mxu0
    %v474 = vpop.f32.mrb[0].mxu0
    %v475 = vpop.f32.mrb[0].mxu0
    %476 = vdwg.mxu0
    %v477 = vmax.f32 %v472, 0.0
    %s478 = scalar_lea.vmem [#allocation2], 256
    %v479 = vld [vmem:[%s478] sm:$0xf]
    %v480 = vld [vmem:[%s478 + $0x4] sm:$0xf]
    %v481 = vld [vmem:[%s478 + $0x8] sm:$0xf]
    %v482 = vld [vmem:[%s478 + $0xc] sm:$0xf]
    %v483 = vld [vmem:[%s478 + $0x10] sm:$0xf]
    %v484 = vld [vmem:[%s478 + $0x14] sm:$0xf]
    %v485 = vld [vmem:[%s478 + $0x18] sm:$0xf]
    %v486 = vld [vmem:[%s478 + $0x1c] sm:$0xf]
    %v487 = vld [vmem:[%s478 + $0x20] sm:$0xf]
    %v488 = vld [vmem:[%s478 + $0x24] sm:$0xf]
    %v489 = vld [vmem:[%s478 + $0x28] sm:$0xf]
    %v490 = vld [vmem:[%s478 + $0x2c] sm:$0xf]
    %v491 = vld [vmem:[%s478 + $0x30] sm:$0xf]
    %v492 = vld [vmem:[%s478 + $0x34] sm:$0xf]
    %v493 = vld [vmem:[%s478 + $0x38] sm:$0xf]
    %v494 = vld [vmem:[%s478 + $0x3c] sm:$0xf]
    %v495 = vld [vmem:[%s2 + $0x4] sm:$0x1]
    %v496 = vpack.c.bf16 %v477, %v477
    %v497 = vlaneseq
    %v498 = vshrl.u32 %v497, 7
    %v499 = vsub.s32 0, %v498
    %v500 = vrot.slane %v495, %v499
    %v517 = vunpack.c.l.b16 %v479
    %v518 = vunpack.c.l.b16 %v480
    %v519 = vunpack.c.l.b16 %v481
    %v520 = vunpack.c.l.b16 %v482
    %v521 = vunpack.c.l.b16 %v483
    %v522 = vunpack.c.l.b16 %v484
    %v523 = vunpack.c.l.b16 %v485
    %v524 = vunpack.c.l.b16 %v486
    %v525 = vunpack.c.l.b16 %v487
    %v526 = vunpack.c.l.b16 %v488
    %v527 = vunpack.c.l.b16 %v489
    %v528 = vunpack.c.l.b16 %v490
    %v529 = vunpack.c.l.b16 %v491
    %v530 = vunpack.c.l.b16 %v492
    %v531 = vunpack.c.l.b16 %v493
    %v532 = vunpack.c.l.b16 %v494
    %v533 = vpack.c.b16 %v518, %v517
    %v534 = vpack.c.b16 %v520, %v519
    %v535 = vpack.c.b16 %v522, %v521
    %v536 = vpack.c.b16 %v524, %v523
    %v537 = vpack.c.b16 %v526, %v525
    %v538 = vpack.c.b16 %v528, %v527
    %v539 = vpack.c.b16 %v530, %v529
    %v540 = vpack.c.b16 %v532, %v531
    %549 = vmatprep.subr.bf16.mxu0 0
    %550 = vmatpush1.bf16.msra.mxu0 %v533
    %551 = vmatprep.subr.bf16.mxu0 0
    %552 = vmatpush1.bf16.msra.mxu0 %v534
    %553 = vmatprep.subr.bf16.mxu0 0
    %554 = vmatpush1.bf16.msra.mxu0 %v535
    %555 = vmatprep.subr.bf16.mxu0 0
    %556 = vmatpush1.bf16.msra.mxu0 %v536
    %557 = vmatprep.subr.bf16.mxu0 0
    %558 = vmatpush1.bf16.msra.mxu0 %v537
    %559 = vmatprep.subr.bf16.mxu0 0
    %560 = vmatpush1.bf16.msra.mxu0 %v538
    %561 = vmatprep.subr.bf16.mxu0 0
    %562 = vmatpush1.bf16.msra.mxu0 %v539
    %563 = vmatprep.subr.bf16.mxu0 0
    %564 = vmatpush1.bf16.msra.mxu0 %v540
    %565 = vmatprep.subr.bf16.mxu0 0
    %566 = vmatpush1.bf16.msra.mxu0 0
    %567 = vmatprep.subr.bf16.mxu0 0
    %568 = vmatpush1.bf16.msra.mxu0 0
    %569 = vmatprep.subr.bf16.mxu0 0
    %570 = vmatpush1.bf16.msra.mxu0 0
    %571 = vmatprep.subr.bf16.mxu0 0
    %572 = vmatpush1.bf16.msra.mxu0 0
    %573 = vmatprep.subr.bf16.mxu0 0
    %574 = vmatpush1.bf16.msra.mxu0 0
    %575 = vmatprep.subr.bf16.mxu0 0
    %576 = vmatpush1.bf16.msra.mxu0 0
    %577 = vmatprep.subr.bf16.mxu0 0
    %578 = vmatpush1.bf16.msra.mxu0 0
    %579 = vmatprep.subr.bf16.mxu0 0
    %580 = vmatpush1.bf16.msra.mxu0 0
    %581 = vmatprep.mubr.bf16.mxu0 0
    %582 = vmatmul.mubr.bf16.gmra.mrb[0].mxu0 %v496
    %v583 = vpop.f32.mrb[0].mxu0
    %v584 = vadd.f32 %v500, %v583
    %v585 = vpop.f32.mrb[0].mxu0
    %v586 = vpop.f32.mrb[0].mxu0
    %v587 = vpop.f32.mrb[0].mxu0
    %588 = vdwg.mxu0
    %v589 = vmax.f32 %v584, 0.0
    %s590 = scalar_lea.vmem [#allocation2], 320
    %v591 = vld [vmem:[%s590] sm:$0xf]
    %v592 = vld [vmem:[%s590 + $0x4] sm:$0xf]
    %v593 = vld [vmem:[%s590 + $0x8] sm:$0xf]
    %v594 = vld [vmem:[%s590 + $0xc] sm:$0xf]
    %v595 = vld [vmem:[%s590 + $0x10] sm:$0xf]
    %v596 = vld [vmem:[%s590 + $0x14] sm:$0xf]
    %v597 = vld [vmem:[%s590 + $0x18] sm:$0xf]
    %v598 = vld [vmem:[%s590 + $0x1c] sm:$0xf]
    %v599 = vld [vmem:[%s590 + $0x20] sm:$0xf]
    %v600 = vld [vmem:[%s590 + $0x24] sm:$0xf]
    %v601 = vld [vmem:[%s590 + $0x28] sm:$0xf]
    %v602 = vld [vmem:[%s590 + $0x2c] sm:$0xf]
    %v603 = vld [vmem:[%s590 + $0x30] sm:$0xf]
    %v604 = vld [vmem:[%s590 + $0x34] sm:$0xf]
    %v605 = vld [vmem:[%s590 + $0x38] sm:$0xf]
    %v606 = vld [vmem:[%s590 + $0x3c] sm:$0xf]
    %v607 = vld [vmem:[%s2 + $0x5] sm:$0x1]
    %v608 = vpack.c.bf16 %v589, %v589
    %v609 = vlaneseq
    %v610 = vshrl.u32 %v609, 7
    %v611 = vsub.s32 0, %v610
    %v612 = vrot.slane %v607, %v611
    %v629 = vunpack.c.l.b16 %v591
    %v630 = vunpack.c.l.b16 %v592
    %v631 = vunpack.c.l.b16 %v593
    %v632 = vunpack.c.l.b16 %v594
    %v633 = vunpack.c.l.b16 %v595
    %v634 = vunpack.c.l.b16 %v596
    %v635 = vunpack.c.l.b16 %v597
    %v636 = vunpack.c.l.b16 %v598
    %v637 = vunpack.c.l.b16 %v599
    %v638 = vunpack.c.l.b16 %v600
    %v639 = vunpack.c.l.b16 %v601
    %v640 = vunpack.c.l.b16 %v602
    %v641 = vunpack.c.l.b16 %v603
    %v642 = vunpack.c.l.b16 %v604
    %v643 = vunpack.c.l.b16 %v605
    %v644 = vunpack.c.l.b16 %v606
    %v645 = vpack.c.b16 %v630, %v629
    %v646 = vpack.c.b16 %v632, %v631
    %v647 = vpack.c.b16 %v634, %v633
    %v648 = vpack.c.b16 %v636, %v635
    %v649 = vpack.c.b16 %v638, %v637
    %v650 = vpack.c.b16 %v640, %v639
    %v651 = vpack.c.b16 %v642, %v641
    %v652 = vpack.c.b16 %v644, %v643
    %661 = vmatprep.subr.bf16.mxu0 0
    %662 = vmatpush1.bf16.msra.mxu0 %v645
    %663 = vmatprep.subr.bf16.mxu0 0
    %664 = vmatpush1.bf16.msra.mxu0 %v646
    %665 = vmatprep.subr.bf16.mxu0 0
    %666 = vmatpush1.bf16.msra.mxu0 %v647
    %667 = vmatprep.subr.bf16.mxu0 0
    %668 = vmatpush1.bf16.msra.mxu0 %v648
    %669 = vmatprep.subr.bf16.mxu0 0
    %670 = vmatpush1.bf16.msra.mxu0 %v649
    %671 = vmatprep.subr.bf16.mxu0 0
    %672 = vmatpush1.bf16.msra.mxu0 %v650
    %673 = vmatprep.subr.bf16.mxu0 0
    %674 = vmatpush1.bf16.msra.mxu0 %v651
    %675 = vmatprep.subr.bf16.mxu0 0
    %676 = vmatpush1.bf16.msra.mxu0 %v652
    %677 = vmatprep.subr.bf16.mxu0 0
    %678 = vmatpush1.bf16.msra.mxu0 0
    %679 = vmatprep.subr.bf16.mxu0 0
    %680 = vmatpush1.bf16.msra.mxu0 0
    %681 = vmatprep.subr.bf16.mxu0 0
    %682 = vmatpush1.bf16.msra.mxu0 0
    %683 = vmatprep.subr.bf16.mxu0 0
    %684 = vmatpush1.bf16.msra.mxu0 0
    %685 = vmatprep.subr.bf16.mxu0 0
    %686 = vmatpush1.bf16.msra.mxu0 0
    %687 = vmatprep.subr.bf16.mxu0 0
    %688 = vmatpush1.bf16.msra.mxu0 0
    %689 = vmatprep.subr.bf16.mxu0 0
    %690 = vmatpush1.bf16.msra.mxu0 0
    %691 = vmatprep.subr.bf16.mxu0 0
    %692 = vmatpush1.bf16.msra.mxu0 0
    %693 = vmatprep.mubr.bf16.mxu0 0
    %694 = vmatmul.mubr.bf16.gmra.mrb[0].mxu0 %v608
    %v695 = vpop.f32.mrb[0].mxu0
    %v696 = vadd.f32 %v612, %v695
    %v697 = vpop.f32.mrb[0].mxu0
    %v698 = vpop.f32.mrb[0].mxu0
    %v699 = vpop.f32.mrb[0].mxu0
    %700 = vdwg.mxu0
    %v701 = vmax.f32 %v696, 0.0
    %s702 = scalar_lea.vmem [#allocation2], 384
    %v703 = vld [vmem:[%s702] sm:$0xf]
    %v704 = vld [vmem:[%s702 + $0x4] sm:$0xf]
    %v705 = vld [vmem:[%s702 + $0x8] sm:$0xf]
    %v706 = vld [vmem:[%s702 + $0xc] sm:$0xf]
    %v707 = vld [vmem:[%s702 + $0x10] sm:$0xf]
    %v708 = vld [vmem:[%s702 + $0x14] sm:$0xf]
    %v709 = vld [vmem:[%s702 + $0x18] sm:$0xf]
    %v710 = vld [vmem:[%s702 + $0x1c] sm:$0xf]
    %v711 = vld [vmem:[%s702 + $0x20] sm:$0xf]
    %v712 = vld [vmem:[%s702 + $0x24] sm:$0xf]
    %v713 = vld [vmem:[%s702 + $0x28] sm:$0xf]
    %v714 = vld [vmem:[%s702 + $0x2c] sm:$0xf]
    %v715 = vld [vmem:[%s702 + $0x30] sm:$0xf]
    %v716 = vld [vmem:[%s702 + $0x34] sm:$0xf]
    %v717 = vld [vmem:[%s702 + $0x38] sm:$0xf]
    %v718 = vld [vmem:[%s702 + $0x3c] sm:$0xf]
    %v719 = vld [vmem:[%s2 + $0x6] sm:$0x1]
    %v720 = vpack.c.bf16 %v701, %v701
    %v721 = vlaneseq
    %v722 = vshrl.u32 %v721, 7
    %v723 = vsub.s32 0, %v722
    %v724 = vrot.slane %v719, %v723
    %v741 = vunpack.c.l.b16 %v703
    %v742 = vunpack.c.l.b16 %v704
    %v743 = vunpack.c.l.b16 %v705
    %v744 = vunpack.c.l.b16 %v706
    %v745 = vunpack.c.l.b16 %v707
    %v746 = vunpack.c.l.b16 %v708
    %v747 = vunpack.c.l.b16 %v709
    %v748 = vunpack.c.l.b16 %v710
    %v749 = vunpack.c.l.b16 %v711
    %v750 = vunpack.c.l.b16 %v712
    %v751 = vunpack.c.l.b16 %v713
    %v752 = vunpack.c.l.b16 %v714
    %v753 = vunpack.c.l.b16 %v715
    %v754 = vunpack.c.l.b16 %v716
    %v755 = vunpack.c.l.b16 %v717
    %v756 = vunpack.c.l.b16 %v718
    %v757 = vpack.c.b16 %v742, %v741
    %v758 = vpack.c.b16 %v744, %v743
    %v759 = vpack.c.b16 %v746, %v745
    %v760 = vpack.c.b16 %v748, %v747
    %v761 = vpack.c.b16 %v750, %v749
    %v762 = vpack.c.b16 %v752, %v751
    %v763 = vpack.c.b16 %v754, %v753
    %v764 = vpack.c.b16 %v756, %v755
    %773 = vmatprep.subr.bf16.mxu0 0
    %774 = vmatpush1.bf16.msra.mxu0 %v757
    %775 = vmatprep.subr.bf16.mxu0 0
    %776 = vmatpush1.bf16.msra.mxu0 %v758
    %777 = vmatprep.subr.bf16.mxu0 0
    %778 = vmatpush1.bf16.msra.mxu0 %v759
    %779 = vmatprep.subr.bf16.mxu0 0
    %780 = vmatpush1.bf16.msra.mxu0 %v760
    %781 = vmatprep.subr.bf16.mxu0 0
    %782 = vmatpush1.bf16.msra.mxu0 %v761
    %783 = vmatprep.subr.bf16.mxu0 0
    %784 = vmatpush1.bf16.msra.mxu0 %v762
    %785 = vmatprep.subr.bf16.mxu0 0
    %786 = vmatpush1.bf16.msra.mxu0 %v763
    %787 = vmatprep.subr.bf16.mxu0 0
    %788 = vmatpush1.bf16.msra.mxu0 %v764
    %789 = vmatprep.subr.bf16.mxu0 0
    %790 = vmatpush1.bf16.msra.mxu0 0
    %791 = vmatprep.subr.bf16.mxu0 0
    %792 = vmatpush1.bf16.msra.mxu0 0
    %793 = vmatprep.subr.bf16.mxu0 0
    %794 = vmatpush1.bf16.msra.mxu0 0
    %795 = vmatprep.subr.bf16.mxu0 0
    %796 = vmatpush1.bf16.msra.mxu0 0
    %797 = vmatprep.subr.bf16.mxu0 0
    %798 = vmatpush1.bf16.msra.mxu0 0
    %799 = vmatprep.subr.bf16.mxu0 0
    %800 = vmatpush1.bf16.msra.mxu0 0
    %801 = vmatprep.subr.bf16.mxu0 0
    %802 = vmatpush1.bf16.msra.mxu0 0
    %803 = vmatprep.subr.bf16.mxu0 0
    %804 = vmatpush1.bf16.msra.mxu0 0
    %805 = vmatprep.mubr.bf16.mxu0 0
    %806 = vmatmul.mubr.bf16.gmra.mrb[0].mxu0 %v720
    %v807 = vpop.f32.mrb[0].mxu0
    %v808 = vadd.f32 %v724, %v807
    %v809 = vpop.f32.mrb[0].mxu0
    %v810 = vpop.f32.mrb[0].mxu0
    %v811 = vpop.f32.mrb[0].mxu0
    %812 = vdwg.mxu0
    %v813 = vmax.f32 %v808, 0.0
    %s814 = scalar_lea.vmem [#allocation2], 448
    %v815 = vld [vmem:[%s814] sm:$0xf]
    %v816 = vld [vmem:[%s814 + $0x4] sm:$0xf]
    %v817 = vld [vmem:[%s814 + $0x8] sm:$0xf]
    %v818 = vld [vmem:[%s814 + $0xc] sm:$0xf]
    %v819 = vld [vmem:[%s814 + $0x10] sm:$0xf]
    %v820 = vld [vmem:[%s814 + $0x14] sm:$0xf]
    %v821 = vld [vmem:[%s814 + $0x18] sm:$0xf]
    %v822 = vld [vmem:[%s814 + $0x1c] sm:$0xf]
    %v823 = vld [vmem:[%s814 + $0x20] sm:$0xf]
    %v824 = vld [vmem:[%s814 + $0x24] sm:$0xf]
    %v825 = vld [vmem:[%s814 + $0x28] sm:$0xf]
    %v826 = vld [vmem:[%s814 + $0x2c] sm:$0xf]
    %v827 = vld [vmem:[%s814 + $0x30] sm:$0xf]
    %v828 = vld [vmem:[%s814 + $0x34] sm:$0xf]
    %v829 = vld [vmem:[%s814 + $0x38] sm:$0xf]
    %v830 = vld [vmem:[%s814 + $0x3c] sm:$0xf]
    %v831 = vld [vmem:[%s2 + $0x7] sm:$0x1]
    %v832 = vpack.c.bf16 %v813, %v813
    %v833 = vlaneseq
    %v834 = vshrl.u32 %v833, 7
    %v835 = vsub.s32 0, %v834
    %v836 = vrot.slane %v831, %v835
    %v853 = vunpack.c.l.b16 %v815
    %v854 = vunpack.c.l.b16 %v816
    %v855 = vunpack.c.l.b16 %v817
    %v856 = vunpack.c.l.b16 %v818
    %v857 = vunpack.c.l.b16 %v819
    %v858 = vunpack.c.l.b16 %v820
    %v859 = vunpack.c.l.b16 %v821
    %v860 = vunpack.c.l.b16 %v822
    %v861 = vunpack.c.l.b16 %v823
    %v862 = vunpack.c.l.b16 %v824
    %v863 = vunpack.c.l.b16 %v825
    %v864 = vunpack.c.l.b16 %v826
    %v865 = vunpack.c.l.b16 %v827
    %v866 = vunpack.c.l.b16 %v828
    %v867 = vunpack.c.l.b16 %v829
    %v868 = vunpack.c.l.b16 %v830
    %v869 = vpack.c.b16 %v854, %v853
    %v870 = vpack.c.b16 %v856, %v855
    %v871 = vpack.c.b16 %v858, %v857
    %v872 = vpack.c.b16 %v860, %v859
    %v873 = vpack.c.b16 %v862, %v861
    %v874 = vpack.c.b16 %v864, %v863
    %v875 = vpack.c.b16 %v866, %v865
    %v876 = vpack.c.b16 %v868, %v867
    %885 = vmatprep.subr.bf16.mxu0 0
    %886 = vmatpush1.bf16.msra.mxu0 %v869
    %887 = vmatprep.subr.bf16.mxu0 0
    %888 = vmatpush1.bf16.msra.mxu0 %v870
    %889 = vmatprep.subr.bf16.mxu0 0
    %890 = vmatpush1.bf16.msra.mxu0 %v871
    %891 = vmatprep.subr.bf16.mxu0 0
    %892 = vmatpush1.bf16.msra.mxu0 %v872
    %893 = vmatprep.subr.bf16.mxu0 0
    %894 = vmatpush1.bf16.msra.mxu0 %v873
    %895 = vmatprep.subr.bf16.mxu0 0
    %896 = vmatpush1.bf16.msra.mxu0 %v874
    %897 = vmatprep.subr.bf16.mxu0 0
    %898 = vmatpush1.bf16.msra.mxu0 %v875
    %899 = vmatprep.subr.bf16.mxu0 0
    %900 = vmatpush1.bf16.msra.mxu0 %v876
    %901 = vmatprep.subr.bf16.mxu0 0
    %902 = vmatpush1.bf16.msra.mxu0 0
    %903 = vmatprep.subr.bf16.mxu0 0
    %904 = vmatpush1.bf16.msra.mxu0 0
    %905 = vmatprep.subr.bf16.mxu0 0
    %906 = vmatpush1.bf16.msra.mxu0 0
    %907 = vmatprep.subr.bf16.mxu0 0
    %908 = vmatpush1.bf16.msra.mxu0 0
    %909 = vmatprep.subr.bf16.mxu0 0
    %910 = vmatpush1.bf16.msra.mxu0 0
    %911 = vmatprep.subr.bf16.mxu0 0
    %912 = vmatpush1.bf16.msra.mxu0 0
    %913 = vmatprep.subr.bf16.mxu0 0
    %914 = vmatpush1.bf16.msra.mxu0 0
    %915 = vmatprep.subr.bf16.mxu0 0
    %916 = vmatpush1.bf16.msra.mxu0 0
    %917 = vmatprep.mubr.bf16.mxu0 0
    %918 = vmatmul.mubr.bf16.gmra.mrb[0].mxu0 %v832
    %v919 = vpop.f32.mrb[0].mxu0
    %v920 = vadd.f32 %v836, %v919
    %v921 = vpop.f32.mrb[0].mxu0
    %v922 = vpop.f32.mrb[0].mxu0
    %v923 = vpop.f32.mrb[0].mxu0
    %924 = vdwg.mxu0
    %925 = vst [vmem:[#allocation5] sm:$0xff] %v920
    // Predicated region
    $region18: #{model_sequential_forward.1} parent=1 // pred_check
      _
    $region19: #{model_sequential_forward.1} parent=1 // pred_check_branch
      %927 = sbr.rel (0) target = $region21
    $region20: #{model_sequential_forward.1} parent=1 // pred_region
      %s929 = ssub.s32 128, 128
      %930 = vsyncadd [#allocation4], %s929
      %s932 = sshll.u32 [#allocation5], 4
      %s933 = int_to_ptr.vmem [resolvable:$true] %s932
      %935 = dma.vmem_to_hbm [thread:$0]  %s933, 128, %s3, [#allocation4]
    $region21: #{model_sequential_forward.1} parent=1 // pred_fallthru
      _
    // Predicated region
    $region22: #{model_sequential_forward.1} parent=1 // pred_check
      _
    $region23: #{model_sequential_forward.1} parent=1 // pred_check_branch
      %937 = sbr.rel (0) target = $region25
    $region24: #{model_sequential_forward.1} parent=1 // pred_region
      %938 = dma.done [#allocation4], 128
    $region25: #{model_sequential_forward.1} parent=1 // pred_fallthru
      _
    %939 = vsyncpa [#allocation3], 1
    %940 = vsyncpa [#allocation4], 1

</llo_original>
